<compile_context>
chip_gen: v7x
topology: tpu7x:2x2x1
jax: 0.10.0
libtpu: 0.0.40
codegen_flags: <defaults>
</compile_context>

<pallas_src>
import jax
import jax.numpy as jnp
from jax.experimental import pallas as pl
from jax.experimental.pallas import tpu as pltpu

# --- meta (stand-in for the pickle-loaded models/bert.args) ----------------
D_MODEL = 32
N_HEADS = 4
D_K = 8
D_V = 8          # stacked QKV packing assumes d_v == d_k (asserted in wrapper)
SEQ = 8
BATCH = 2
LN_EPS = 1e-5


def mha_kernel(xs_ref, wqkv_ref, bqkv_ref, mbias_ref, woh_ref, obg_ref,
               out_ref, attn_ref, acc_ref):
    # Per grid step (b = program_id(0), h = program_id(1)):
    #   xs_ref   : [3, S, D]    bf16  stacked Q/K/V activations of batch b
    #   wqkv_ref : [3, D, d_k]  bf16  head h's W_Q/W_K/W_V columns (scale folded into W_Q)
    #   bqkv_ref : [3, 1, d_k]  f32   head h's projection biases
    #   mbias_ref: [S, S]       f32   additive mask bias (0 / -1e9) of batch b
    #   woh_ref  : [d_v, D]     bf16  head h's rows of W_O
    #   obg_ref  : [3, D]       f32   rows: b_O, ln_gamma, ln_beta
    #   out_ref  : [S, D]       f32   written only on the last head step
    #   attn_ref : [S, S]       f32   head h's attention weights of batch b
    #   acc_ref  : [S, D]       f32   VMEM accumulator across the head axis
    h = pl.program_id(1)

    @pl.when(h == 0)
    def _init():
        acc_ref[...] = jnp.zeros_like(acc_ref)

    # Fused head-sliced Q/K/V projection: one leading-batch bf16 MXU matmul
    # (batch dim = {q,k,v}), f32 accumulation, f32 bias add.
    qkv = jnp.einsum("gsd,gdk->gsk", xs_ref[...], wqkv_ref[...],
                     preferred_element_type=jnp.float32) + bqkv_ref[...]
    q, k, v = qkv[0], qkv[1], qkv[2]                      # [S, d_k] f32 each

    # Scores: contract on the last dim of both operands (no explicit .T); the
    # 1/sqrt(d_k) scale is already folded into W_Q/b_Q; mask is an f32 bias.
    scores = jnp.einsum("qd,kd->qk",
                        q.astype(jnp.bfloat16), k.astype(jnp.bfloat16),
                        preferred_element_type=jnp.float32)
    scores = scores + mbias_ref[...]

    # Softmax in f32 with exact normalization (attn is an exported output).
    m = jnp.max(scores, axis=-1, keepdims=True)
    e = jnp.exp(scores - m)
    attn = e / jnp.sum(e, axis=-1, keepdims=True)
    attn_ref[...] = attn

    # Context + this head's slice of the output projection; the head reduction
    # happens on the f32 VMEM accumulator across the head grid axis.
    ctx = jnp.dot(attn.astype(jnp.bfloat16), v.astype(jnp.bfloat16),
                  preferred_element_type=jnp.float32)              # [S, d_v]
    acc_ref[...] += jnp.dot(ctx.astype(jnp.bfloat16), woh_ref[...],
                            preferred_element_type=jnp.float32)    # [S, D]

    @pl.when(h == pl.num_programs(1) - 1)
    def _finalize():
        obg = obg_ref[...]
        b_o, gamma, beta = obg[0:1, :], obg[1:2, :], obg[2:3, :]
        residual = xs_ref[0].astype(jnp.float32)                   # Q activations
        out = acc_ref[...] + b_o + residual
        # LayerNorm (biased variance, matching torch.nn.LayerNorm).
        mean = jnp.mean(out, axis=-1, keepdims=True)
        cent = out - mean
        var = jnp.mean(cent * cent, axis=-1, keepdims=True)
        out_ref[...] = cent * jax.lax.rsqrt(var + LN_EPS) * gamma + beta


def multi_head_attention(Q, K, V, attn_mask, params):
    """Q, K, V: [B, S, d_model] f32; attn_mask: [B, S, S] bool (True = masked)."""
    B, S, D = Q.shape
    H, dk, dv = N_HEADS, D_K, D_V
    assert dv == dk, "stacked QKV packing requires d_v == d_k"

    # Fold the 1/sqrt(d_k) scale into the Q projection (weight + bias).
    scale = 1.0 / jnp.sqrt(jnp.float32(dk))
    wq, bq = params["wq"] * scale, params["bq"] * scale

    # Wrapper-side packing (one-time XLA ops). MXU operands go to bf16; all
    # VPU/EUP math (bias add, mask, softmax, LayerNorm) stays f32.
    xs = jnp.stack([Q, K, V], axis=0).astype(jnp.bfloat16)              # [3, B, S, D]
    w_qkv = jnp.stack([wq, params["wk"], params["wv"]], axis=0)         # [3, D, H*dk]
    w_qkv = (w_qkv.reshape(3, D, H, dk).transpose(0, 2, 1, 3)
             .astype(jnp.bfloat16))                                     # [3, H, D, dk]
    b_qkv = jnp.stack([bq, params["bk"], params["bv"]], axis=0)         # [3, 1, H*dk]
    b_qkv = b_qkv.reshape(3, H, dk)[:, :, None, :]                      # [3, H, 1, dk] f32
    # TODO(synk): at production sizes pass per-row key lengths via
    # PrefetchScalarGridSpec and build the additive bias in-kernel instead of
    # DMA-ing a [B, S, S] f32 tensor.
    mask_bias = jnp.where(attn_mask, jnp.float32(-1e9), jnp.float32(0.0))   # [B, S, S]
    wo_heads = params["wo"].reshape(H, dv, D).astype(jnp.bfloat16)      # [H, dv, D]
    obg = jnp.concatenate([params["bo"], params["gamma"], params["beta"]], 0)  # [3, D]

    out, attn = pl.pallas_call(
        mha_kernel,
        grid=(B, H),            # batch: parallel (megacore), head: reduction
        in_specs=[
            pl.BlockSpec((3, None, S, D), lambda b, h: (0, b, 0, 0)),    # xs
            pl.BlockSpec((3, None, D, dk), lambda b, h: (0, h, 0, 0)),   # w_qkv (head slice via DMA)
            pl.BlockSpec((3, None, 1, dk), lambda b, h: (0, h, 0, 0)),   # b_qkv
            pl.BlockSpec((None, S, S), lambda b, h: (b, 0, 0)),          # mask bias
            pl.BlockSpec((None, dv, D), lambda b, h: (h, 0, 0)),         # wo (head slice via DMA)
            pl.BlockSpec((3, D), lambda b, h: (0, 0)),                   # b_O / gamma / beta
        ],
        out_specs=[
            pl.BlockSpec((None, S, D), lambda b, h: (b, 0, 0)),          # out (resident across h)
            pl.BlockSpec((None, None, S, S), lambda b, h: (b, h, 0, 0)), # attn
        ],
        out_shape=[
            jax.ShapeDtypeStruct((B, S, D), jnp.float32),
            # TODO(synk): at production S this [B, H, S, S] f32 write dominates
            # HBM traffic; emit bf16 or drop it if only `out` is consumed.
            jax.ShapeDtypeStruct((B, H, S, S), jnp.float32),
        ],
        scratch_shapes=[pltpu.VMEM((S, D), jnp.float32)],
        compiler_params=pltpu.CompilerParams(
            dimension_semantics=("parallel", "arbitrary")),
    )(xs, w_qkv, b_qkv, mask_bias, wo_heads, obg)

    return out, attn


def reference(Q, K, V, attn_mask, params):
    """Pure-JAX f32 reference mirroring the PyTorch forward."""
    B, S, D = Q.shape
    q = (Q @ params["wq"] + params["bq"][0]).reshape(B, S, N_HEADS, D_K).transpose(0, 2, 1, 3)
    k = (K @ params["wk"] + params["bk"][0]).reshape(B, S, N_HEADS, D_K).transpose(0, 2, 1, 3)
    v = (V @ params["wv"] + params["bv"][0]).reshape(B, S, N_HEADS, D_V).transpose(0, 2, 1, 3)
    scores = jnp.einsum("bhqd,bhkd->bhqk", q, k) / jnp.sqrt(jnp.float32(D_K))
    scores = jnp.where(attn_mask[:, None, :, :], -1e9, scores)
    attn = jax.nn.softmax(scores, axis=-1)
    ctx = jnp.einsum("bhqk,bhkd->bhqd", attn, v)
    ctx = ctx.transpose(0, 2, 1, 3).reshape(B, S, N_HEADS * D_V)
    out = ctx @ params["wo"] + params["bo"][0] + Q
    mean = jnp.mean(out, axis=-1, keepdims=True)
    var = jnp.mean((out - mean) ** 2, axis=-1, keepdims=True)
    normed = (out - mean) / jnp.sqrt(var + LN_EPS)
    return normed * params["gamma"][0] + params["beta"][0], attn


def init_params(key):
    ks = jax.random.split(key, 8)
    s = 0.1
    return {
        "wq": s * jax.random.normal(ks[0], (D_MODEL, N_HEADS * D_K), jnp.float32),
        "bq": s * jax.random.normal(ks[1], (1, N_HEADS * D_K), jnp.float32),
        "wk": s * jax.random.normal(ks[2], (D_MODEL, N_HEADS * D_K), jnp.float32),
        "bk": s * jax.random.normal(ks[3], (1, N_HEADS * D_K), jnp.float32),
        "wv": s * jax.random.normal(ks[4], (D_MODEL, N_HEADS * D_V), jnp.float32),
        "bv": s * jax.random.normal(ks[5], (1, N_HEADS * D_V), jnp.float32),
        # NOTE: the PyTorch module instantiates a fresh nn.Linear / nn.LayerNorm
        # inside forward(); here they are deterministic fixed parameters.
        "wo": s * jax.random.normal(ks[6], (N_HEADS * D_V, D_MODEL), jnp.float32),
        "bo": s * jax.random.normal(ks[7], (1, D_MODEL), jnp.float32),
        "gamma": jnp.ones((1, D_MODEL), jnp.float32),
        "beta": jnp.zeros((1, D_MODEL), jnp.float32),
    }


if __name__ == "__main__":
    key = jax.random.PRNGKey(0)
    kq, kk, kv, kp = jax.random.split(key, 4)

    Q = jax.random.normal(kq, (BATCH, SEQ, D_MODEL), jnp.float32)
    K = jax.random.normal(kk, (BATCH, SEQ, D_MODEL), jnp.float32)
    V = jax.random.normal(kv, (BATCH, SEQ, D_MODEL), jnp.float32)

    # Padding-style mask: last 2 key positions masked out for every query.
    key_pad = jnp.arange(SEQ) >= (SEQ - 2)                  # [S]
    attn_mask = jnp.broadcast_to(key_pad[None, None, :], (BATCH, SEQ, SEQ))

    params = init_params(kp)

    out, attn = multi_head_attention(Q, K, V, attn_mask, params)
    out = jax.block_until_ready(out)
    attn = jax.block_until_ready(attn)

    out_ref, attn_ref = reference(Q, K, V, attn_mask, params)
    # Tolerance covers bf16 MXU operands (f32 accumulation) vs. the f32 reference.
    assert jnp.allclose(out, out_ref, atol=2e-2, rtol=2e-2), "output mismatch"
    assert jnp.allclose(attn, attn_ref, atol=2e-2, rtol=2e-2), "attn mismatch"

    print("KERNEL_OK")
</pallas_src>

<mosaic_0001>
module attributes {stable_mosaic.version = 11 : i64} {
  func.func @mha_kernel(%arg0: i32, %arg1: i32, %arg2: memref<3x1x8x32xbf16, #tpu.memory_space<vmem>>, %arg3: memref<3x1x32x8xbf16, #tpu.memory_space<vmem>>, %arg4: memref<3x1x1x8xf32, #tpu.memory_space<vmem>>, %arg5: memref<1x8x8xf32, #tpu.memory_space<vmem>>, %arg6: memref<1x8x32xbf16, #tpu.memory_space<vmem>>, %arg7: memref<3x32xf32, #tpu.memory_space<vmem>>, %arg8: memref<1x8x32xf32, #tpu.memory_space<vmem>>, %arg9: memref<1x1x8x8xf32, #tpu.memory_space<vmem>>, %arg10: memref<8x32xf32, #tpu.memory_space<vmem>>) attributes {dimension_semantics = [#tpu.dimension_semantics<parallel>, #tpu.dimension_semantics<arbitrary>], iteration_bounds = array<i64: 2, 4>, scalar_prefetch = 0 : i64, scratch_operands = 1 : i64, tpu.core_type = #tpu.core_type<tc>, window_params = [{transform_indices = @transform_0, window_bounds = array<i64: 3, 1, 8, 32>}, {transform_indices = @transform_1, window_bounds = array<i64: 3, 1, 32, 8>}, {transform_indices = @transform_2, window_bounds = array<i64: 3, 1, 1, 8>}, {transform_indices = @transform_3, window_bounds = array<i64: 1, 8, 8>}, {transform_indices = @transform_4, window_bounds = array<i64: 1, 8, 32>}, {pipeline_mode = #tpu.pipeline_mode<synchronous>, transform_indices = @transform_5, window_bounds = array<i64: 3, 32>}, {transform_indices = @transform_6, window_bounds = array<i64: 1, 8, 32>}, {transform_indices = @transform_7, window_bounds = array<i64: 1, 1, 8, 8>}]} {
    %c0_i32 = arith.constant 0 : i32
    %0 = arith.cmpi eq, %arg1, %c0_i32 : i32
    %1 = arith.extui %0 : i1 to i32
    %c0_i32_0 = arith.constant 0 : i32
    %2 = arith.cmpi ne, %1, %c0_i32_0 : i32
    scf.if %2 {
      %cst_32 = arith.constant 0.000000e+00 : f32
      %49 = vector.broadcast %cst_32 : f32 to vector<8x32xf32>
      %c0_33 = arith.constant 0 : index
      %c0_34 = arith.constant 0 : index
      %50 = vector.load %arg10[%c0_33, %c0_34] : memref<8x32xf32, #tpu.memory_space<vmem>>, vector<8x32xf32>
      tpu.vector_store %arg10[%c0_33, %c0_34], %49 {strides = array<i32>} : memref<8x32xf32, #tpu.memory_space<vmem>>, vector<8x32xf32>,
    } else {
    }
    %c0 = arith.constant 0 : index
    %c0_1 = arith.constant 0 : index
    %c0_2 = arith.constant 0 : index
    %c0_3 = arith.constant 0 : index
    %3 = vector.load %arg2[%c0, %c0_1, %c0_2, %c0_3] : memref<3x1x8x32xbf16, #tpu.memory_space<vmem>>, vector<3x1x8x32xbf16>
    %4 = vector.shape_cast %3 : vector<3x1x8x32xbf16> to vector<3x8x32xbf16>
    %c0_4 = arith.constant 0 : index
    %c0_5 = arith.constant 0 : index
    %c0_6 = arith.constant 0 : index
    %c0_7 = arith.constant 0 : index
    %5 = vector.load %arg3[%c0_4, %c0_5, %c0_6, %c0_7] : memref<3x1x32x8xbf16, #tpu.memory_space<vmem>>, vector<3x1x32x8xbf16>
    %6 = vector.shape_cast %5 : vector<3x1x32x8xbf16> to vector<3x32x8xbf16>
    "tpu.trace_start"() <{level = 10 : i32, message = "gsd,gdk->gsk"}> : () -> ()
    %cst = arith.constant dense<0.000000e+00> : vector<3x8x8xf32>
    %7 = tpu.matmul %4, %6, %cst {dimension_numbers = #tpu.dot_dimension_numbers<[2], [1], [1], [2], [0, 0, 0, 1, 1, 2], [0], [0]>} : vector<3x8x32xbf16>, vector<3x32x8xbf16>, vector<3x8x8xf32> -> vector<3x8x8xf32>
    "tpu.trace_stop"() : () -> ()
    %c0_8 = arith.constant 0 : index
    %c0_9 = arith.constant 0 : index
    %c0_10 = arith.constant 0 : index
    %c0_11 = arith.constant 0 : index
    %8 = vector.load %arg4[%c0_8, %c0_9, %c0_10, %c0_11] : memref<3x1x1x8xf32, #tpu.memory_space<vmem>>, vector<3x1x1x8xf32>
    %9 = vector.shape_cast %8 : vector<3x1x1x8xf32> to vector<3x1x8xf32>
    %10 = vector.broadcast %9 : vector<3x1x8xf32> to vector<3x8x8xf32>
    %11 = arith.addf %7, %10 : vector<3x8x8xf32>
    %12 = vector.extract_strided_slice %11 {offsets = [0, 0, 0], sizes = [1, 8, 8], strides = [1, 1, 1]} : vector<3x8x8xf32> to vector<1x8x8xf32>
    %13 = vector.shape_cast %12 : vector<1x8x8xf32> to vector<8x8xf32>
    %14 = vector.extract_strided_slice %11 {offsets = [1, 0, 0], sizes = [1, 8, 8], strides = [1, 1, 1]} : vector<3x8x8xf32> to vector<1x8x8xf32>
    %15 = vector.shape_cast %14 : vector<1x8x8xf32> to vector<8x8xf32>
    %16 = vector.extract_strided_slice %11 {offsets = [2, 0, 0], sizes = [1, 8, 8], strides = [1, 1, 1]} : vector<3x8x8xf32> to vector<1x8x8xf32>
    %17 = vector.shape_cast %16 : vector<1x8x8xf32> to vector<8x8xf32>
    %18 = arith.truncf %13 : vector<8x8xf32> to vector<8x8xbf16>
    %19 = arith.truncf %15 : vector<8x8xf32> to vector<8x8xbf16>
    "tpu.trace_start"() <{level = 10 : i32, message = "qd,kd->qk"}> : () -> ()
    %cst_12 = arith.constant dense<0.000000e+00> : vector<8x8xf32>
    %20 = tpu.matmul %18, %19, %cst_12 {dimension_numbers = #tpu.dot_dimension_numbers<[1], [1], [0], [0], [0, 0, 1, 0], [], []>} : vector<8x8xbf16>, vector<8x8xbf16>, vector<8x8xf32> -> vector<8x8xf32>
    "tpu.trace_stop"() : () -> ()
    %c0_13 = arith.constant 0 : index
    %c0_14 = arith.constant 0 : index
    %c0_15 = arith.constant 0 : index
    %21 = vector.load %arg5[%c0_13, %c0_14, %c0_15] : memref<1x8x8xf32, #tpu.memory_space<vmem>>, vector<1x8x8xf32>
    %22 = vector.shape_cast %21 : vector<1x8x8xf32> to vector<8x8xf32>
    %23 = arith.addf %20, %22 : vector<8x8xf32>
    %cst_16 = arith.constant dense<0xFF800000> : vector<8xf32>
    %24 = vector.multi_reduction <maximumf>, %23, %cst_16 [1] : vector<8x8xf32> to vector<8xf32>
    %25 = vector.shape_cast %24 : vector<8xf32> to vector<8x1xf32>
    %26 = vector.broadcast %25 : vector<8x1xf32> to vector<8x8xf32>
    %27 = arith.subf %23, %26 : vector<8x8xf32>
    %28 = math.exp %27 : vector<8x8xf32>
    %cst_17 = arith.constant dense<0.000000e+00> : vector<8xf32>
    %29 = vector.multi_reduction <add>, %28, %cst_17 [1] : vector<8x8xf32> to vector<8xf32>
    %30 = vector.shape_cast %29 : vector<8xf32> to vector<8x1xf32>
    %31 = vector.broadcast %30 : vector<8x1xf32> to vector<8x8xf32>
    %32 = arith.divf %28, %31 : vector<8x8xf32>
    %c0_18 = arith.constant 0 : index
    %c0_19 = arith.constant 0 : index
    %c0_20 = arith.constant 0 : index
    %c0_21 = arith.constant 0 : index
    %33 = vector.load %arg9[%c0_18, %c0_19, %c0_20, %c0_21] : memref<1x1x8x8xf32, #tpu.memory_space<vmem>>, vector<1x1x8x8xf32>
    %34 = vector.shape_cast %33 : vector<1x1x8x8xf32> to vector<8x8xf32>
    %35 = vector.shape_cast %32 : vector<8x8xf32> to vector<1x1x8x8xf32>
    tpu.vector_store %arg9[%c0_18, %c0_19, %c0_20, %c0_21], %35 {strides = array<i32>} : memref<1x1x8x8xf32, #tpu.memory_space<vmem>>, vector<1x1x8x8xf32>,
    %36 = arith.truncf %32 : vector<8x8xf32> to vector<8x8xbf16>
    %37 = arith.truncf %17 : vector<8x8xf32> to vector<8x8xbf16>
    %cst_22 = arith.constant dense<0.000000e+00> : vector<8x8xf32>
    %38 = tpu.matmul %36, %37, %cst_22 {dimension_numbers = #tpu.dot_dimension_numbers<[1], [0], [0], [1], [0, 0, 1, 1], [], []>} : vector<8x8xbf16>, vector<8x8xbf16>, vector<8x8xf32> -> vector<8x8xf32>
    %c0_23 = arith.constant 0 : index
    %c0_24 = arith.constant 0 : index
    %39 = vector.load %arg10[%c0_23, %c0_24] : memref<8x32xf32, #tpu.memory_space<vmem>>, vector<8x32xf32>
    %40 = arith.truncf %38 : vector<8x8xf32> to vector<8x8xbf16>
    %c0_25 = arith.constant 0 : index
    %c0_26 = arith.constant 0 : index
    %c0_27 = arith.constant 0 : index
    %41 = vector.load %arg6[%c0_25, %c0_26, %c0_27] : memref<1x8x32xbf16, #tpu.memory_space<vmem>>, vector<1x8x32xbf16>
    %42 = vector.shape_cast %41 : vector<1x8x32xbf16> to vector<8x32xbf16>
    %cst_28 = arith.constant dense<0.000000e+00> : vector<8x32xf32>
    %43 = tpu.matmul %40, %42, %cst_28 {dimension_numbers = #tpu.dot_dimension_numbers<[1], [0], [0], [1], [0, 0, 1, 1], [], []>} : vector<8x8xbf16>, vector<8x32xbf16>, vector<8x32xf32> -> vector<8x32xf32>
    %44 = arith.addf %39, %43 : vector<8x32xf32>
    %c0_29 = arith.constant 0 : index
    %c0_30 = arith.constant 0 : index
    %45 = vector.load %arg10[%c0_29, %c0_30] : memref<8x32xf32, #tpu.memory_space<vmem>>, vector<8x32xf32>
    tpu.vector_store %arg10[%c0_29, %c0_30], %44 {strides = array<i32>} : memref<8x32xf32, #tpu.memory_space<vmem>>, vector<8x32xf32>,
    %c3_i32 = arith.constant 3 : i32
    %46 = arith.cmpi eq, %arg1, %c3_i32 : i32
    %47 = arith.extui %46 : i1 to i32
    %c0_i32_31 = arith.constant 0 : i32
    %48 = arith.cmpi ne, %47, %c0_i32_31 : i32
    scf.if %48 {
      %c0_32 = arith.constant 0 : index
      %c0_33 = arith.constant 0 : index
      %49 = vector.load %arg7[%c0_32, %c0_33] : memref<3x32xf32, #tpu.memory_space<vmem>>, vector<3x32xf32>
      %50 = vector.extract_strided_slice %49 {offsets = [0, 0], sizes = [1, 32], strides = [1, 1]} : vector<3x32xf32> to vector<1x32xf32>
      %51 = vector.extract_strided_slice %49 {offsets = [1, 0], sizes = [1, 32], strides = [1, 1]} : vector<3x32xf32> to vector<1x32xf32>
      %52 = vector.extract_strided_slice %49 {offsets = [2, 0], sizes = [1, 32], strides = [1, 1]} : vector<3x32xf32> to vector<1x32xf32>
      %c0_34 = arith.constant 0 : index
      %c0_35 = arith.constant 0 : index
      %c0_36 = arith.constant 0 : index
      %c0_37 = arith.constant 0 : index
      %53 = vector.load %arg2[%c0_34, %c0_35, %c0_36, %c0_37] : memref<3x1x8x32xbf16, #tpu.memory_space<vmem>>, vector<1x1x8x32xbf16>
      %54 = vector.shape_cast %53 : vector<1x1x8x32xbf16> to vector<8x32xbf16>
      %55 = arith.extf %54 : vector<8x32xbf16> to vector<8x32xf32>
      %c0_38 = arith.constant 0 : index
      %c0_39 = arith.constant 0 : index
      %56 = vector.load %arg10[%c0_38, %c0_39] : memref<8x32xf32, #tpu.memory_space<vmem>>, vector<8x32xf32>
      %57 = vector.broadcast %50 : vector<1x32xf32> to vector<8x32xf32>
      %58 = arith.addf %56, %57 : vector<8x32xf32>
      %59 = arith.addf %58, %55 : vector<8x32xf32>
      %cst_40 = arith.constant dense<0.000000e+00> : vector<8xf32>
      %60 = vector.multi_reduction <add>, %59, %cst_40 [1] : vector<8x32xf32> to vector<8xf32>
      %61 = vector.shape_cast %60 : vector<8xf32> to vector<8x1xf32>
      %cst_41 = arith.constant 3.200000e+01 : f32
      %62 = vector.broadcast %cst_41 : f32 to vector<8x1xf32>
      %63 = arith.divf %61, %62 : vector<8x1xf32>
      %64 = vector.broadcast %63 : vector<8x1xf32> to vector<8x32xf32>
      %65 = arith.subf %59, %64 : vector<8x32xf32>
      %66 = arith.mulf %65, %65 : vector<8x32xf32>
      %cst_42 = arith.constant dense<0.000000e+00> : vector<8xf32>
      %67 = vector.multi_reduction <add>, %66, %cst_42 [1] : vector<8x32xf32> to vector<8xf32>
      %68 = vector.shape_cast %67 : vector<8xf32> to vector<8x1xf32>
      %cst_43 = arith.constant 3.200000e+01 : f32
      %69 = vector.broadcast %cst_43 : f32 to vector<8x1xf32>
      %70 = arith.divf %68, %69 : vector<8x1xf32>
      %cst_44 = arith.constant 9.99999974E-6 : f32
      %71 = vector.broadcast %cst_44 : f32 to vector<8x1xf32>
      %72 = arith.addf %70, %71 : vector<8x1xf32>
      %73 = math.rsqrt %72 : vector<8x1xf32>
      %74 = vector.broadcast %73 : vector<8x1xf32> to vector<8x32xf32>
      %75 = arith.mulf %65, %74 : vector<8x32xf32>
      %76 = vector.broadcast %51 : vector<1x32xf32> to vector<8x32xf32>
      %77 = arith.mulf %75, %76 : vector<8x32xf32>
      %78 = vector.broadcast %52 : vector<1x32xf32> to vector<8x32xf32>
      %79 = arith.addf %77, %78 : vector<8x32xf32>
      %c0_45 = arith.constant 0 : index
      %c0_46 = arith.constant 0 : index
      %c0_47 = arith.constant 0 : index
      %80 = vector.load %arg8[%c0_45, %c0_46, %c0_47] : memref<1x8x32xf32, #tpu.memory_space<vmem>>, vector<1x8x32xf32>
      %81 = vector.shape_cast %80 : vector<1x8x32xf32> to vector<8x32xf32>
      %82 = vector.shape_cast %79 : vector<8x32xf32> to vector<1x8x32xf32>
      tpu.vector_store %arg8[%c0_45, %c0_46, %c0_47], %82 {strides = array<i32>} : memref<1x8x32xf32, #tpu.memory_space<vmem>>, vector<1x8x32xf32>,
    } else {
    }
    return
  }
  func.func @transform_0(%arg0: i32, %arg1: i32) -> (i32, i32, i32, i32) {
    %c0_i32 = arith.constant 0 : i32
    %c0_i32_0 = arith.constant 0 : i32
    %c0_i32_1 = arith.constant 0 : i32
    %c0_i32_2 = arith.constant 0 : i32
    return %c0_i32, %arg0, %c0_i32_0, %c0_i32_1 : i32, i32, i32, i32
  }
  func.func @transform_1(%arg0: i32, %arg1: i32) -> (i32, i32, i32, i32) {
    %c0_i32 = arith.constant 0 : i32
    %c0_i32_0 = arith.constant 0 : i32
    %c0_i32_1 = arith.constant 0 : i32
    %c0_i32_2 = arith.constant 0 : i32
    return %c0_i32, %arg1, %c0_i32_0, %c0_i32_1 : i32, i32, i32, i32
  }
  func.func @transform_2(%arg0: i32, %arg1: i32) -> (i32, i32, i32, i32) {
    %c0_i32 = arith.constant 0 : i32
    %c0_i32_0 = arith.constant 0 : i32
    %c0_i32_1 = arith.constant 0 : i32
    %c0_i32_2 = arith.constant 0 : i32
    return %c0_i32, %arg1, %c0_i32_0, %c0_i32_1 : i32, i32, i32, i32
  }
  func.func @transform_3(%arg0: i32, %arg1: i32) -> (i32, i32, i32) {
    %c0_i32 = arith.constant 0 : i32
    %c0_i32_0 = arith.constant 0 : i32
    %c0_i32_1 = arith.constant 0 : i32
    return %arg0, %c0_i32, %c0_i32_0 : i32, i32, i32
  }
  func.func @transform_4(%arg0: i32, %arg1: i32) -> (i32, i32, i32) {
    %c0_i32 = arith.constant 0 : i32
    %c0_i32_0 = arith.constant 0 : i32
    %c0_i32_1 = arith.constant 0 : i32
    return %arg1, %c0_i32, %c0_i32_0 : i32, i32, i32
  }
  func.func @transform_5(%arg0: i32, %arg1: i32) -> (i32, i32) {
    %c0_i32 = arith.constant 0 : i32
    %c0_i32_0 = arith.constant 0 : i32
    %c0_i32_1 = arith.constant 0 : i32
    return %c0_i32, %c0_i32_0 : i32, i32
  }
  func.func @transform_6(%arg0: i32, %arg1: i32) -> (i32, i32, i32) {
    %c0_i32 = arith.constant 0 : i32
    %c0_i32_0 = arith.constant 0 : i32
    %c0_i32_1 = arith.constant 0 : i32
    return %arg0, %c0_i32, %c0_i32_0 : i32, i32, i32
  }
  func.func @transform_7(%arg0: i32, %arg1: i32) -> (i32, i32, i32, i32) {
    %c0_i32 = arith.constant 0 : i32
    %c0_i32_0 = arith.constant 0 : i32
    %c0_i32_1 = arith.constant 0 : i32
    return %arg0, %arg1, %c0_i32, %c0_i32_0 : i32, i32, i32, i32
  }
}

</mosaic_0001>

<llo_original>
// kernel: tpu_custom_call.1
$region0: #{tpu_custom_call.1}
  #allocation0 [shape = 'u32[]', space=smem, size = 0x4, offset = 0x4, fixed_abs, tag = 'smem constant byte address 0x4 - core index']
  #allocation1 [shape = 'u32[144,128]{1,0:T(1,128)}', space=vmem, size = 0x12000, scoped, tag = 'internal scratch']
  #allocation2 [shape = 'f32[8,32]{1,0:T(8,128)}', space=vmem, size = 0x1000, scoped, tag = 'scratch operand']
  %s0 = inlined_call_operand.vmem [shape: bf16[3,2,8,32], index: 0, kind: input, shape index: {}]
  %s1 = inlined_call_operand.vmem [shape: bf16[3,4,32,8], index: 1, kind: input, shape index: {}]
  %s2 = inlined_call_operand.vmem [shape: f32[3,4,1,8], index: 2, kind: input, shape index: {}]
  %s3 = inlined_call_operand.vmem [shape: f32[2,8,8], index: 3, kind: input, shape index: {}]
  %s4 = inlined_call_operand.vmem [shape: bf16[4,8,32], index: 4, kind: input, shape index: {}]
  %s5 = inlined_call_operand.vmem [shape: f32[3,32], index: 5, kind: input, shape index: {}]
  %s6 = inlined_call_operand.hbm [shape: f32[2,8,32], index: 6, kind: output, shape index: {0}]
  %s7 = inlined_call_operand.hbm [shape: f32[2,4,8,8], index: 7, kind: output, shape index: {1}]
  %8 = xla_tuple %s6, %s7
  %s9 = sld [smem:[#allocation0]]
  $region189: #{tpu_custom_call.1} parent=0
    _
  %s11 = ssub.s32 1, %s9
  %s12 = scalar_select 0, %s11, %s9
  $region1: #{tpu_custom_call.1} parent=0
    #allocation3 [shape = 'u8[12288]{0}', space=vmem, size = 0x3000, scoped, tag = 'input window, operand 0']
    #allocation4 [shape = 'u8[49152]{0}', space=vmem, size = 0xc000, scoped, tag = 'input window, operand 1']
    #allocation5 [shape = 'u8[3072]{0}', space=vmem, size = 0xc00, scoped, tag = 'input window, operand 2']
    #allocation6 [shape = 'u8[8192]{0}', space=vmem, size = 0x2000, scoped, tag = 'output window, operand 0']
    #allocation7 [shape = 's32[2]{0}', space=sflag, size = 0x8, scoped, tag = 'scoped memory for tpu_custom_call.1']
    #allocation8 [shape = 'u8[8192]{0}', space=vmem, size = 0x2000, scoped, tag = 'output window, operand 1']
    #allocation9 [shape = 's32[2]{0}', space=sflag, size = 0x8, scoped, tag = 'scoped memory for tpu_custom_call.1']
    %13 = vsyncpa [#allocation7], 0
    %s14 = scalar_lea.sflag [#allocation7], 1
    %15 = vsyncpa %s14, 0
    %16 = vsyncpa [#allocation9], 0
    %s17 = scalar_lea.sflag [#allocation9], 1
    %18 = vsyncpa %s17, 0
    loop: start=0, step=1, limit=10
    $region2: #{tpu_custom_call.1} parent=1 // loop_pre_header
      _
    $region3: #{tpu_custom_call.1} parent=1 // loop_header
      %s20 = sphi 0, %s24
      %p21 = scmp.ge.s32.totalorder %s20, 10
      %s27 = sphi 0, %s39
      %s28 = sphi 0, %s35
      %s29 = sphi 0, %s27
      %s30 = sphi 0, %s28
      %s31 = sphi 0, %s29
      %s32 = sphi 0, %s30
      %s42 = sphi 0, %s44
      %s45 = sphi 0, %s42
      %s46 = sphi 0, %s45
      %s62 = sphi 0, %s46
      %s68 = sphi 0, %s70
      %s71 = sphi 0, %s68
      %s72 = sphi 0, %s71
      %s88 = sphi 0, %s72
      %s94 = sphi 0, %s96
      %s97 = sphi 0, %s94
      %s98 = sphi 0, %s97
      %s114 = sphi 0, %s98
      %s120 = sphi 0, %s122
      %s123 = sphi 0, %s120
      %s124 = sphi 0, %s123
      %s140 = sphi 0, %s124
      %s146 = sphi 0, %s148
      %s149 = sphi 0, %s146
      %s150 = sphi 0, %s149
      %s166 = sphi 0, %s150
      %s170 = sphi 0, %s170
      %s172 = sphi 0, %s170
      %s173 = sphi 0, %s172
      %s187 = sphi 0, %s173
      %s193 = sphi 0, %s195
      %s196 = sphi 0, %s193
      %s197 = sphi 0, %s196
      %s213 = sphi 0, %s197
      %s221 = sphi 0, %s223
      %s224 = sphi 0, %s221
      %s225 = sphi 0, %s224
      %s241 = sphi 0, %s225
    $region4: #{tpu_custom_call.1} parent=1 // loop_header_branch
      %23 = sbr.rel (%p21) target = $region8
    $region5: #{tpu_custom_call.1} parent=1 // loop_body
      %s25 = ssub.s32 %s20, 1
      %s26 = ssub.s32 %s20, 2
      %s33 = sadd.s32 1, %s28
      %p34 = scmp.ge.s32.totalorder %s33, 4
      %s35 = scalar_select %p34, 0, %s33
      %s36 = sadd.s32 1, %s27
      %s37 = scalar_select %p34, %s36, %s27
      %p38 = scmp.ge.s32.totalorder %s37, 2
      %s39 = scalar_select %p38, 0, %s37
      %s40 = ssub.s32 %s27, %s39
      %p41 = scmp.eq.s32.totalorder %s40, 0
      %s43 = sadd.s32 %s42, 1
      %s44 = scalar_select %p41, %s42, %s43
      %p47 = pneg %p41
      %p48 = scmp.eq.s32.totalorder %s20, 7
      %p49 = por %p47, %p48
      %p50 = scmp.ne.s32.totalorder %s42, %s45
      %p51 = scmp.eq.s32.totalorder %s20, 0
      %p52 = por %p50, %p51
      %p53 = scmp.ne.s32.totalorder %s42, %s45
      %p54 = scmp.eq.s32.totalorder %s25, 7
      %p55 = por %p53, %p54
      %p56 = scmp.ne.s32.totalorder %s45, %s46
      %p57 = scmp.eq.s32.totalorder %s25, 0
      %p58 = por %p56, %p57
      %p59 = scmp.ne.s32.totalorder %s45, %s46
      %p60 = scmp.eq.s32.totalorder %s26, 7
      %p61 = por %p59, %p60
      %p63 = scmp.ne.s32.totalorder %s46, %s62
      %p64 = scmp.eq.s32.totalorder %s26, 0
      %p65 = por %p63, %p64
      %s66 = ssub.s32 %s28, %s35
      %p67 = scmp.eq.s32.totalorder %s66, 0
      %s69 = sadd.s32 %s68, 1
      %s70 = scalar_select %p67, %s68, %s69
      %p73 = pneg %p67
      %p74 = scmp.eq.s32.totalorder %s20, 7
      %p75 = por %p73, %p74
      %p76 = scmp.ne.s32.totalorder %s68, %s71
      %p77 = scmp.eq.s32.totalorder %s20, 0
      %p78 = por %p76, %p77
      %p79 = scmp.ne.s32.totalorder %s68, %s71
      %p80 = scmp.eq.s32.totalorder %s25, 7
      %p81 = por %p79, %p80
      %p82 = scmp.ne.s32.totalorder %s71, %s72
      %p83 = scmp.eq.s32.totalorder %s25, 0
      %p84 = por %p82, %p83
      %p85 = scmp.ne.s32.totalorder %s71, %s72
      %p86 = scmp.eq.s32.totalorder %s26, 7
      %p87 = por %p85, %p86
      %p89 = scmp.ne.s32.totalorder %s72, %s88
      %p90 = scmp.eq.s32.totalorder %s26, 0
      %p91 = por %p89, %p90
      %s92 = ssub.s32 %s28, %s35
      %p93 = scmp.eq.s32.totalorder %s92, 0
      %s95 = sadd.s32 %s94, 1
      %s96 = scalar_select %p93, %s94, %s95
      %p99 = pneg %p93
      %p100 = scmp.eq.s32.totalorder %s20, 7
      %p101 = por %p99, %p100
      %p102 = scmp.ne.s32.totalorder %s94, %s97
      %p103 = scmp.eq.s32.totalorder %s20, 0
      %p104 = por %p102, %p103
      %p105 = scmp.ne.s32.totalorder %s94, %s97
      %p106 = scmp.eq.s32.totalorder %s25, 7
      %p107 = por %p105, %p106
      %p108 = scmp.ne.s32.totalorder %s97, %s98
      %p109 = scmp.eq.s32.totalorder %s25, 0
      %p110 = por %p108, %p109
      %p111 = scmp.ne.s32.totalorder %s97, %s98
      %p112 = scmp.eq.s32.totalorder %s26, 7
      %p113 = por %p111, %p112
      %p115 = scmp.ne.s32.totalorder %s98, %s114
      %p116 = scmp.eq.s32.totalorder %s26, 0
      %p117 = por %p115, %p116
      %s118 = ssub.s32 %s27, %s39
      %p119 = scmp.eq.s32.totalorder %s118, 0
      %s121 = sadd.s32 %s120, 1
      %s122 = scalar_select %p119, %s120, %s121
      %p125 = pneg %p119
      %p126 = scmp.eq.s32.totalorder %s20, 7
      %p127 = por %p125, %p126
      %p128 = scmp.ne.s32.totalorder %s120, %s123
      %p129 = scmp.eq.s32.totalorder %s20, 0
      %p130 = por %p128, %p129
      %p131 = scmp.ne.s32.totalorder %s120, %s123
      %p132 = scmp.eq.s32.totalorder %s25, 7
      %p133 = por %p131, %p132
      %p134 = scmp.ne.s32.totalorder %s123, %s124
      %p135 = scmp.eq.s32.totalorder %s25, 0
      %p136 = por %p134, %p135
      %p137 = scmp.ne.s32.totalorder %s123, %s124
      %p138 = scmp.eq.s32.totalorder %s26, 7
      %p139 = por %p137, %p138
      %p141 = scmp.ne.s32.totalorder %s124, %s140
      %p142 = scmp.eq.s32.totalorder %s26, 0
      %p143 = por %p141, %p142
      %s144 = ssub.s32 %s28, %s35
      %p145 = scmp.eq.s32.totalorder %s144, 0
      %s147 = sadd.s32 %s146, 1
      %s148 = scalar_select %p145, %s146, %s147
      %p151 = pneg %p145
      %p152 = scmp.eq.s32.totalorder %s20, 7
      %p153 = por %p151, %p152
      %p154 = scmp.ne.s32.totalorder %s146, %s149
      %p155 = scmp.eq.s32.totalorder %s20, 0
      %p156 = por %p154, %p155
      %p157 = scmp.ne.s32.totalorder %s146, %s149
      %p158 = scmp.eq.s32.totalorder %s25, 7
      %p159 = por %p157, %p158
      %p160 = scmp.ne.s32.totalorder %s149, %s150
      %p161 = scmp.eq.s32.totalorder %s25, 0
      %p162 = por %p160, %p161
      %p163 = scmp.ne.s32.totalorder %s149, %s150
      %p164 = scmp.eq.s32.totalorder %s26, 7
      %p165 = por %p163, %p164
      %p167 = scmp.ne.s32.totalorder %s150, %s166
      %p168 = scmp.eq.s32.totalorder %s26, 0
      %p169 = por %p167, %p168
      %s171 = sadd.s32 %s170, 1
      %p174 = scmp.eq.s32.totalorder %s20, 7
      %p175 = scmp.ne.s32.totalorder %s170, %s172
      %p176 = scmp.eq.s32.totalorder %s20, 0
      %p177 = por %p175, %p176
      %p178 = scmp.ne.s32.totalorder %s170, %s172
      %p179 = scmp.eq.s32.totalorder %s25, 7
      %p180 = por %p178, %p179
      %p181 = scmp.ne.s32.totalorder %s172, %s173
      %p182 = scmp.eq.s32.totalorder %s25, 0
      %p183 = por %p181, %p182
      %p184 = scmp.ne.s32.totalorder %s172, %s173
      %p185 = scmp.eq.s32.totalorder %s26, 7
      %p186 = por %p184, %p185
      %p188 = scmp.ne.s32.totalorder %s173, %s187
      %p189 = scmp.eq.s32.totalorder %s26, 0
      %p190 = por %p188, %p189
      %s191 = ssub.s32 %s27, %s39
      %p192 = scmp.eq.s32.totalorder %s191, 0
      %s194 = sadd.s32 %s193, 1
      %s195 = scalar_select %p192, %s193, %s194
      %p198 = pneg %p192
      %p199 = scmp.eq.s32.totalorder %s20, 7
      %p200 = por %p198, %p199
      %p201 = scmp.ne.s32.totalorder %s193, %s196
      %p202 = scmp.eq.s32.totalorder %s20, 0
      %p203 = por %p201, %p202
      %p204 = scmp.ne.s32.totalorder %s193, %s196
      %p205 = scmp.eq.s32.totalorder %s25, 7
      %p206 = por %p204, %p205
      %p207 = scmp.ne.s32.totalorder %s196, %s197
      %p208 = scmp.eq.s32.totalorder %s25, 0
      %p209 = por %p207, %p208
      %p210 = scmp.ne.s32.totalorder %s196, %s197
      %p211 = scmp.eq.s32.totalorder %s26, 7
      %p212 = por %p210, %p211
      %p214 = scmp.ne.s32.totalorder %s197, %s213
      %p215 = scmp.eq.s32.totalorder %s26, 0
      %p216 = por %p214, %p215
      %s217 = ssub.s32 %s27, %s39
      %s218 = ssub.s32 %s28, %s35
      %s219 = sor.u32 %s217, %s218
      %p220 = scmp.eq.s32.totalorder %s219, 0
      %s222 = sadd.s32 %s221, 1
      %s223 = scalar_select %p220, %s221, %s222
      %p226 = pneg %p220
      %p227 = scmp.eq.s32.totalorder %s20, 7
      %p228 = por %p226, %p227
      %p229 = scmp.ne.s32.totalorder %s221, %s224
      %p230 = scmp.eq.s32.totalorder %s20, 0
      %p231 = por %p229, %p230
      %p232 = scmp.ne.s32.totalorder %s221, %s224
      %p233 = scmp.eq.s32.totalorder %s25, 7
      %p234 = por %p232, %p233
      %p235 = scmp.ne.s32.totalorder %s224, %s225
      %p236 = scmp.eq.s32.totalorder %s25, 0
      %p237 = por %p235, %p236
      %p238 = scmp.ne.s32.totalorder %s224, %s225
      %p239 = scmp.eq.s32.totalorder %s26, 7
      %p240 = por %p238, %p239
      %p242 = scmp.ne.s32.totalorder %s225, %s241
      %p243 = scmp.eq.s32.totalorder %s26, 0
      %p244 = por %p242, %p243
      %p245 = scmp.le.s32.totalorder 1, %s20
      %p246 = scmp.lt.s32.totalorder %s20, 9
      %p247 = pnand %p245, %p246
      %p248 = pneg %p247
      // Predicated region
      $region9: #{tpu_custom_call.1} parent=5 // pred_check
        _
      $region10: #{tpu_custom_call.1} parent=5 // pred_check_branch
        %250 = sbr.rel (%p247) target = $region12
      $region11: #{tpu_custom_call.1} parent=5 // pred_region
        %s251 = ssub.s32 %s20, 1
        // Predicated region
        $region13: #{tpu_custom_call.1} parent=11 // pred_check
          %p252 = pneg %p183
        $region14: #{tpu_custom_call.1} parent=11 // pred_check_branch
          %254 = sbr.rel (%p252) target = $region16
        $region15: #{tpu_custom_call.1} parent=11 // pred_region
          _
        $region16: #{tpu_custom_call.1} parent=11 // pred_fallthru
          _
      $region12: #{tpu_custom_call.1} parent=5 // pred_fallthru
        _
      %p255 = scmp.lt.s32.totalorder %s20, 8
      // Predicated region
      $region17: #{tpu_custom_call.1} parent=5 // pred_check
        %p256 = pneg %p255
      $region18: #{tpu_custom_call.1} parent=5 // pred_check_branch
        %258 = sbr.rel (%p256) target = $region20
      $region19: #{tpu_custom_call.1} parent=5 // pred_region
        // Predicated region
        $region21: #{tpu_custom_call.1} parent=19 // pred_check
          %p259 = pneg %p52
        $region22: #{tpu_custom_call.1} parent=19 // pred_check_branch
          %261 = sbr.rel (%p259) target = $region24
        $region23: #{tpu_custom_call.1} parent=19 // pred_region
          %s262 = sand.u32 %s42, 1
          %s263 = sand.u32 %s42, 1
          %s264 = smul.addr %s263, 12
          %s265 = scalar_lea.vmem [#allocation3], %s264
          %s266 = smul.addr %s27, 4
          %s267 = scalar_lea.vmem %s0, %s266
          // Predicated region
          $region25: #{tpu_custom_call.1} parent=23 // pred_check
            _
          $region26: #{tpu_custom_call.1} parent=23 // pred_check_branch
            %269 = sbr.rel (0) target = $region28
          $region27: #{tpu_custom_call.1} parent=23 // pred_region
            // Predicated region
            $region29: #{tpu_custom_call.1} parent=27 // pred_check
              _
            $region30: #{tpu_custom_call.1} parent=27 // pred_check_branch
              %271 = sbr.rel target = $region32
            $region31: #{tpu_custom_call.1} parent=27 // pred_region
              // Predicated region
              $region44: #{tpu_custom_call.1} parent=31 // pred_check
                _
              $region45: #{tpu_custom_call.1} parent=31 // pred_check_branch
                %290 = sbr.rel (0) target = $region47
              $region46: #{tpu_custom_call.1} parent=31 // pred_region
                loop: start=0, step=1, limit=1
                $region48: #{tpu_custom_call.1} parent=46 // loop_pre_header
                  _
                $region49: #{tpu_custom_call.1} parent=46 // loop_header
                  %s292 = sphi 0, %s296
                  %p293 = scmp.ge.s32.totalorder %s292, 1
                  %s297 = sphi %s267, %s267
                  %s298 = sphi %s265, %s265
                $region50: #{tpu_custom_call.1} parent=46 // loop_header_branch
                  %295 = sbr.rel (%p293) target = $region54
                $region51: #{tpu_custom_call.1} parent=46 // loop_body
                  _
                $region52: #{tpu_custom_call.1} parent=46 // loop_footer
                  %s296 = sadd.s32 1, %s292
                $region53: #{tpu_custom_call.1} parent=46 // loop_footer_branch
                  %291 = sbr.rel target = $region49
                $region54: #{tpu_custom_call.1} parent=46 // loop_exit
                  _
                loop: start=0, step=1, limit=1
                $region55: #{tpu_custom_call.1} parent=46 // loop_pre_header
                  _
                $region56: #{tpu_custom_call.1} parent=46 // loop_header
                  %s301 = sphi 0, %s305
                  %p302 = scmp.ge.s32.totalorder %s301, 1
                  %s306 = sphi %s267, %s267
                  %s307 = sphi %s265, %s265
                $region57: #{tpu_custom_call.1} parent=46 // loop_header_branch
                  %304 = sbr.rel (%p302) target = $region61
                $region58: #{tpu_custom_call.1} parent=46 // loop_body
                  %v308 = vld [vmem:[%s306] sm:$0xf]
                  %309 = vst [vmem:[%s307] sm:$0xf] %v308
                  %v310 = vld [vmem:[%s306 + $0x8] sm:$0xf]
                  %311 = vst [vmem:[%s307 + $0x4] sm:$0xf] %v310
                  %v312 = vld [vmem:[%s306 + $0x10] sm:$0xf]
                  %313 = vst [vmem:[%s307 + $0x8] sm:$0xf] %v312
                $region59: #{tpu_custom_call.1} parent=46 // loop_footer
                  %s305 = sadd.s32 1, %s301
                $region60: #{tpu_custom_call.1} parent=46 // loop_footer_branch
                  %300 = sbr.rel target = $region56
                $region61: #{tpu_custom_call.1} parent=46 // loop_exit
                  _
              $region47: #{tpu_custom_call.1} parent=31 // pred_fallthru
                _
            $region32: #{tpu_custom_call.1} parent=27 // pred_fallthru
              _
            // Predicated region
            $region33: #{tpu_custom_call.1} parent=27 // pred_check
              _
            $region34: #{tpu_custom_call.1} parent=27 // pred_check_branch
              %273 = sbr.rel (0) target = $region36
            $region35: #{tpu_custom_call.1} parent=27 // pred_region
              loop: start=0, step=1, limit=1
              $region37: #{tpu_custom_call.1} parent=35 // loop_pre_header
                _
              $region38: #{tpu_custom_call.1} parent=35 // loop_header
                %s276 = sphi 0, %s280
                %p277 = scmp.ge.s32.totalorder %s276, 1
                %s281 = sphi %s267, %s267
                %s282 = sphi %s265, %s265
              $region39: #{tpu_custom_call.1} parent=35 // loop_header_branch
                %279 = sbr.rel (%p277) target = $region43
              $region40: #{tpu_custom_call.1} parent=35 // loop_body
                %v283 = vld [vmem:[%s281] sm:$0xf]
                %284 = vst [vmem:[%s282] sm:$0xf] %v283
                %v285 = vld [vmem:[%s281 + $0x8] sm:$0xf]
                %286 = vst [vmem:[%s282 + $0x4] sm:$0xf] %v285
                %v287 = vld [vmem:[%s281 + $0x10] sm:$0xf]
                %288 = vst [vmem:[%s282 + $0x8] sm:$0xf] %v287
              $region41: #{tpu_custom_call.1} parent=35 // loop_footer
                %s280 = sadd.s32 1, %s276
              $region42: #{tpu_custom_call.1} parent=35 // loop_footer_branch
                %275 = sbr.rel target = $region38
              $region43: #{tpu_custom_call.1} parent=35 // loop_exit
                _
            $region36: #{tpu_custom_call.1} parent=27 // pred_fallthru
              _
          $region28: #{tpu_custom_call.1} parent=23 // pred_fallthru
            _
          %314 = vnop
        $region24: #{tpu_custom_call.1} parent=19 // pred_fallthru
          _
        // Predicated region
        $region62: #{tpu_custom_call.1} parent=19 // pred_check
          %p315 = pneg %p78
        $region63: #{tpu_custom_call.1} parent=19 // pred_check_branch
          %317 = sbr.rel (%p315) target = $region65
        $region64: #{tpu_custom_call.1} parent=19 // pred_region
          %s318 = sand.u32 %s68, 1
          %s319 = sand.u32 %s68, 1
          %s320 = smul.addr %s319, 48
          %s321 = scalar_lea.vmem [#allocation4], %s320
          %s322 = smul.addr %s28, 4
          %s323 = smul.addr %s322, 4
          %s324 = scalar_lea.vmem %s1, %s323
          // Predicated region
          $region66: #{tpu_custom_call.1} parent=64 // pred_check
            _
          $region67: #{tpu_custom_call.1} parent=64 // pred_check_branch
            %326 = sbr.rel (0) target = $region69
          $region68: #{tpu_custom_call.1} parent=64 // pred_region
            // Predicated region
            $region70: #{tpu_custom_call.1} parent=68 // pred_check
              _
            $region71: #{tpu_custom_call.1} parent=68 // pred_check_branch
              %328 = sbr.rel target = $region73
            $region72: #{tpu_custom_call.1} parent=68 // pred_region
              // Predicated region
              $region85: #{tpu_custom_call.1} parent=72 // pred_check
                _
              $region86: #{tpu_custom_call.1} parent=72 // pred_check_branch
                %365 = sbr.rel (0) target = $region88
              $region87: #{tpu_custom_call.1} parent=72 // pred_region
                loop: start=0, step=1, limit=1
                $region89: #{tpu_custom_call.1} parent=87 // loop_pre_header
                  _
                $region90: #{tpu_custom_call.1} parent=87 // loop_header
                  %s367 = sphi 0, %s371
                  %p368 = scmp.ge.s32.totalorder %s367, 1
                  %s372 = sphi %s324, %s324
                  %s373 = sphi %s321, %s321
                $region91: #{tpu_custom_call.1} parent=87 // loop_header_branch
                  %370 = sbr.rel (%p368) target = $region95
                $region92: #{tpu_custom_call.1} parent=87 // loop_body
                  _
                $region93: #{tpu_custom_call.1} parent=87 // loop_footer
                  %s371 = sadd.s32 1, %s367
                $region94: #{tpu_custom_call.1} parent=87 // loop_footer_branch
                  %366 = sbr.rel target = $region90
                $region95: #{tpu_custom_call.1} parent=87 // loop_exit
                  _
                loop: start=0, step=1, limit=1
                $region96: #{tpu_custom_call.1} parent=87 // loop_pre_header
                  _
                $region97: #{tpu_custom_call.1} parent=87 // loop_header
                  %s376 = sphi 0, %s380
                  %p377 = scmp.ge.s32.totalorder %s376, 1
                  %s381 = sphi %s324, %s324
                  %s382 = sphi %s321, %s321
                $region98: #{tpu_custom_call.1} parent=87 // loop_header_branch
                  %379 = sbr.rel (%p377) target = $region102
                $region99: #{tpu_custom_call.1} parent=87 // loop_body
                  %v383 = vld [vmem:[%s381] sm:$0xf]
                  %384 = vst [vmem:[%s382] sm:$0xf] %v383
                  %v385 = vld [vmem:[%s381 + $0x4] sm:$0xf]
                  %386 = vst [vmem:[%s382 + $0x4] sm:$0xf] %v385
                  %v387 = vld [vmem:[%s381 + $0x8] sm:$0xf]
                  %388 = vst [vmem:[%s382 + $0x8] sm:$0xf] %v387
                  %v389 = vld [vmem:[%s381 + $0xc] sm:$0xf]
                  %390 = vst [vmem:[%s382 + $0xc] sm:$0xf] %v389
                  %v391 = vld [vmem:[%s381 + $0x40] sm:$0xf]
                  %392 = vst [vmem:[%s382 + $0x10] sm:$0xf] %v391
                  %v393 = vld [vmem:[%s381 + $0x44] sm:$0xf]
                  %394 = vst [vmem:[%s382 + $0x14] sm:$0xf] %v393
                  %v395 = vld [vmem:[%s381 + $0x48] sm:$0xf]
                  %396 = vst [vmem:[%s382 + $0x18] sm:$0xf] %v395
                  %v397 = vld [vmem:[%s381 + $0x4c] sm:$0xf]
                  %398 = vst [vmem:[%s382 + $0x1c] sm:$0xf] %v397
                  %v399 = vld [vmem:[%s381 + $0x80] sm:$0xf]
                  %400 = vst [vmem:[%s382 + $0x20] sm:$0xf] %v399
                  %v401 = vld [vmem:[%s381 + $0x84] sm:$0xf]
                  %402 = vst [vmem:[%s382 + $0x24] sm:$0xf] %v401
                  %v403 = vld [vmem:[%s381 + $0x88] sm:$0xf]
                  %404 = vst [vmem:[%s382 + $0x28] sm:$0xf] %v403
                  %v405 = vld [vmem:[%s381 + $0x8c] sm:$0xf]
                  %406 = vst [vmem:[%s382 + $0x2c] sm:$0xf] %v405
                $region100: #{tpu_custom_call.1} parent=87 // loop_footer
                  %s380 = sadd.s32 1, %s376
                $region101: #{tpu_custom_call.1} parent=87 // loop_footer_branch
                  %375 = sbr.rel target = $region97
                $region102: #{tpu_custom_call.1} parent=87 // loop_exit
                  _
              $region88: #{tpu_custom_call.1} parent=72 // pred_fallthru
                _
            $region73: #{tpu_custom_call.1} parent=68 // pred_fallthru
              _
            // Predicated region
            $region74: #{tpu_custom_call.1} parent=68 // pred_check
              _
            $region75: #{tpu_custom_call.1} parent=68 // pred_check_branch
              %330 = sbr.rel (0) target = $region77
            $region76: #{tpu_custom_call.1} parent=68 // pred_region
              loop: start=0, step=1, limit=1
              $region78: #{tpu_custom_call.1} parent=76 // loop_pre_header
                _
              $region79: #{tpu_custom_call.1} parent=76 // loop_header
                %s333 = sphi 0, %s337
                %p334 = scmp.ge.s32.totalorder %s333, 1
                %s338 = sphi %s324, %s324
                %s339 = sphi %s321, %s321
              $region80: #{tpu_custom_call.1} parent=76 // loop_header_branch
                %336 = sbr.rel (%p334) target = $region84
              $region81: #{tpu_custom_call.1} parent=76 // loop_body
                %v340 = vld [vmem:[%s338] sm:$0xf]
                %341 = vst [vmem:[%s339] sm:$0xf] %v340
                %v342 = vld [vmem:[%s338 + $0x4] sm:$0xf]
                %343 = vst [vmem:[%s339 + $0x4] sm:$0xf] %v342
                %v344 = vld [vmem:[%s338 + $0x8] sm:$0xf]
                %345 = vst [vmem:[%s339 + $0x8] sm:$0xf] %v344
                %v346 = vld [vmem:[%s338 + $0xc] sm:$0xf]
                %347 = vst [vmem:[%s339 + $0xc] sm:$0xf] %v346
                %v348 = vld [vmem:[%s338 + $0x40] sm:$0xf]
                %349 = vst [vmem:[%s339 + $0x10] sm:$0xf] %v348
                %v350 = vld [vmem:[%s338 + $0x44] sm:$0xf]
                %351 = vst [vmem:[%s339 + $0x14] sm:$0xf] %v350
                %v352 = vld [vmem:[%s338 + $0x48] sm:$0xf]
                %353 = vst [vmem:[%s339 + $0x18] sm:$0xf] %v352
                %v354 = vld [vmem:[%s338 + $0x4c] sm:$0xf]
                %355 = vst [vmem:[%s339 + $0x1c] sm:$0xf] %v354
                %v356 = vld [vmem:[%s338 + $0x80] sm:$0xf]
                %357 = vst [vmem:[%s339 + $0x20] sm:$0xf] %v356
                %v358 = vld [vmem:[%s338 + $0x84] sm:$0xf]
                %359 = vst [vmem:[%s339 + $0x24] sm:$0xf] %v358
                %v360 = vld [vmem:[%s338 + $0x88] sm:$0xf]
                %361 = vst [vmem:[%s339 + $0x28] sm:$0xf] %v360
                %v362 = vld [vmem:[%s338 + $0x8c] sm:$0xf]
                %363 = vst [vmem:[%s339 + $0x2c] sm:$0xf] %v362
              $region82: #{tpu_custom_call.1} parent=76 // loop_footer
                %s337 = sadd.s32 1, %s333
              $region83: #{tpu_custom_call.1} parent=76 // loop_footer_branch
                %332 = sbr.rel target = $region79
              $region84: #{tpu_custom_call.1} parent=76 // loop_exit
                _
            $region77: #{tpu_custom_call.1} parent=68 // pred_fallthru
              _
          $region69: #{tpu_custom_call.1} parent=64 // pred_fallthru
            _
          %407 = vnop
        $region65: #{tpu_custom_call.1} parent=19 // pred_fallthru
          _
        // Predicated region
        $region103: #{tpu_custom_call.1} parent=19 // pred_check
          %p408 = pneg %p104
        $region104: #{tpu_custom_call.1} parent=19 // pred_check_branch
          %410 = sbr.rel (%p408) target = $region106
        $region105: #{tpu_custom_call.1} parent=19 // pred_region
          %s411 = sand.u32 %s94, 1
          %s412 = sand.u32 %s94, 1
          %s413 = smul.addr %s412, 3
          %s414 = scalar_lea.vmem [#allocation5], %s413
          %s415 = scalar_lea.vmem %s2, %s28
          // Predicated region
          $region107: #{tpu_custom_call.1} parent=105 // pred_check
            _
          $region108: #{tpu_custom_call.1} parent=105 // pred_check_branch
            %417 = sbr.rel (0) target = $region110
          $region109: #{tpu_custom_call.1} parent=105 // pred_region
            // Predicated region
            $region111: #{tpu_custom_call.1} parent=109 // pred_check
              _
            $region112: #{tpu_custom_call.1} parent=109 // pred_check_branch
              %419 = sbr.rel target = $region114
            $region113: #{tpu_custom_call.1} parent=109 // pred_region
              // Predicated region
              $region126: #{tpu_custom_call.1} parent=113 // pred_check
                _
              $region127: #{tpu_custom_call.1} parent=113 // pred_check_branch
                %438 = sbr.rel (0) target = $region129
              $region128: #{tpu_custom_call.1} parent=113 // pred_region
                loop: start=0, step=1, limit=1
                $region130: #{tpu_custom_call.1} parent=128 // loop_pre_header
                  _
                $region131: #{tpu_custom_call.1} parent=128 // loop_header
                  %s441 = sphi 0, %s445
                  %p442 = scmp.ge.s32.totalorder %s441, 1
                  %s446 = sphi %s415, %s415
                  %s447 = sphi %s414, %s414
                $region132: #{tpu_custom_call.1} parent=128 // loop_header_branch
                  %444 = sbr.rel (%p442) target = $region136
                $region133: #{tpu_custom_call.1} parent=128 // loop_body
                  %v448 = vld [vmem:[%s446] sm:$0x1]
                  %449 = vst [vmem:[%s447] sm:$0x1] %v448
                  %v450 = vld [vmem:[%s446 + $0x4] sm:$0x1]
                  %451 = vst [vmem:[%s447 + $0x1] sm:$0x1] %v450
                  %v452 = vld [vmem:[%s446 + $0x8] sm:$0x1]
                  %453 = vst [vmem:[%s447 + $0x2] sm:$0x1] %v452
                $region134: #{tpu_custom_call.1} parent=128 // loop_footer
                  %s445 = sadd.s32 1, %s441
                $region135: #{tpu_custom_call.1} parent=128 // loop_footer_branch
                  %440 = sbr.rel target = $region131
                $region136: #{tpu_custom_call.1} parent=128 // loop_exit
                  _
              $region129: #{tpu_custom_call.1} parent=113 // pred_fallthru
                _
            $region114: #{tpu_custom_call.1} parent=109 // pred_fallthru
              _
            // Predicated region
            $region115: #{tpu_custom_call.1} parent=109 // pred_check
              _
            $region116: #{tpu_custom_call.1} parent=109 // pred_check_branch
              %421 = sbr.rel (0) target = $region118
            $region117: #{tpu_custom_call.1} parent=109 // pred_region
              loop: start=0, step=1, limit=1
              $region119: #{tpu_custom_call.1} parent=117 // loop_pre_header
                _
              $region120: #{tpu_custom_call.1} parent=117 // loop_header
                %s424 = sphi 0, %s428
                %p425 = scmp.ge.s32.totalorder %s424, 1
                %s429 = sphi %s415, %s415
                %s430 = sphi %s414, %s414
              $region121: #{tpu_custom_call.1} parent=117 // loop_header_branch
                %427 = sbr.rel (%p425) target = $region125
              $region122: #{tpu_custom_call.1} parent=117 // loop_body
                %v431 = vld [vmem:[%s429] sm:$0x1]
                %432 = vst [vmem:[%s430] sm:$0x1] %v431
                %v433 = vld [vmem:[%s429 + $0x4] sm:$0x1]
                %434 = vst [vmem:[%s430 + $0x1] sm:$0x1] %v433
                %v435 = vld [vmem:[%s429 + $0x8] sm:$0x1]
                %436 = vst [vmem:[%s430 + $0x2] sm:$0x1] %v435
              $region123: #{tpu_custom_call.1} parent=117 // loop_footer
                %s428 = sadd.s32 1, %s424
              $region124: #{tpu_custom_call.1} parent=117 // loop_footer_branch
                %423 = sbr.rel target = $region120
              $region125: #{tpu_custom_call.1} parent=117 // loop_exit
                _
            $region118: #{tpu_custom_call.1} parent=109 // pred_fallthru
              _
          $region110: #{tpu_custom_call.1} parent=105 // pred_fallthru
            _
          %454 = vnop
        $region106: #{tpu_custom_call.1} parent=19 // pred_fallthru
          _
        // Predicated region
        $region137: #{tpu_custom_call.1} parent=19 // pred_check
          %p455 = pneg %p130
        $region138: #{tpu_custom_call.1} parent=19 // pred_check_branch
          %457 = sbr.rel (%p455) target = $region140
        $region139: #{tpu_custom_call.1} parent=19 // pred_region
          %p458 = scmp.lt.s32.totalorder %s27, 1
          %s459 = scalar_select %p458, %s27, 1
          %s460 = smul.addr %s459, 8
          %s461 = scalar_lea.vmem %s3, %s460
        $region140: #{tpu_custom_call.1} parent=19 // pred_fallthru
          _
        // Predicated region
        $region141: #{tpu_custom_call.1} parent=19 // pred_check
          %p462 = pneg %p156
        $region142: #{tpu_custom_call.1} parent=19 // pred_check_branch
          %464 = sbr.rel (%p462) target = $region144
        $region143: #{tpu_custom_call.1} parent=19 // pred_region
          %p465 = scmp.lt.s32.totalorder %s28, 3
          %s466 = scalar_select %p465, %s28, 3
          %s467 = smul.addr %s466, 4
          %s468 = scalar_lea.vmem %s4, %s467
        $region144: #{tpu_custom_call.1} parent=19 // pred_fallthru
          _
      $region20: #{tpu_custom_call.1} parent=5 // pred_fallthru
        _
      %p469 = scmp.le.s32.totalorder 1, %s20
      %p470 = scmp.lt.s32.totalorder %s20, 9
      %p471 = pnand %p469, %p470
      %p472 = pneg %p471
      // Predicated region
      $region145: #{tpu_custom_call.1} parent=5 // pred_check
        _
      $region146: #{tpu_custom_call.1} parent=5 // pred_check_branch
        %474 = sbr.rel (%p471) target = $region148
      $region147: #{tpu_custom_call.1} parent=5 // pred_region
        %s475 = ssub.s32 %s20, 1
        %s476 = sand.u32 %s45, 1
        %s477 = sand.u32 %s45, 1
        %s478 = smul.addr %s477, 12
        %s479 = scalar_lea.vmem [#allocation3], %s478
        // Predicated region
        $region149: #{tpu_custom_call.1} parent=147 // pred_check
          %p480 = pneg %p58
        $region150: #{tpu_custom_call.1} parent=147 // pred_check_branch
          %482 = sbr.rel (%p480) target = $region152
        $region151: #{tpu_custom_call.1} parent=147 // pred_region
          _
        $region152: #{tpu_custom_call.1} parent=147 // pred_fallthru
          _
        %s483 = sand.u32 %s71, 1
        %s484 = sand.u32 %s71, 1
        %s485 = smul.addr %s484, 48
        %s486 = scalar_lea.vmem [#allocation4], %s485
        // Predicated region
        $region153: #{tpu_custom_call.1} parent=147 // pred_check
          %p487 = pneg %p84
        $region154: #{tpu_custom_call.1} parent=147 // pred_check_branch
          %489 = sbr.rel (%p487) target = $region156
        $region155: #{tpu_custom_call.1} parent=147 // pred_region
          _
        $region156: #{tpu_custom_call.1} parent=147 // pred_fallthru
          _
        %s490 = sand.u32 %s97, 1
        %s491 = sand.u32 %s97, 1
        %s492 = smul.addr %s491, 3
        %s493 = scalar_lea.vmem [#allocation5], %s492
        // Predicated region
        $region157: #{tpu_custom_call.1} parent=147 // pred_check
          %p494 = pneg %p110
        $region158: #{tpu_custom_call.1} parent=147 // pred_check_branch
          %496 = sbr.rel (%p494) target = $region160
        $region159: #{tpu_custom_call.1} parent=147 // pred_region
          _
        $region160: #{tpu_custom_call.1} parent=147 // pred_fallthru
          _
        %s497 = sand.u32 %s45, 1
        %s498 = sand.u32 %s45, 1
        %s499 = smul.addr %s498, 12
        %s500 = scalar_lea.vmem [#allocation3], %s499
        %p501 = pneg %p58
        %p502 = pneg %p55
        %s503 = sand.u32 %s71, 1
        %s504 = sand.u32 %s71, 1
        %s505 = smul.addr %s504, 48
        %s506 = scalar_lea.vmem [#allocation4], %s505
        %p507 = pneg %p84
        %p508 = pneg %p81
        %s509 = sand.u32 %s97, 1
        %s510 = sand.u32 %s97, 1
        %s511 = smul.addr %s510, 3
        %s512 = scalar_lea.vmem [#allocation5], %s511
        %p513 = pneg %p110
        %p514 = pneg %p107
        %p515 = scmp.lt.s32.totalorder %s29, 1
        %s516 = scalar_select %p515, %s29, 1
        %s517 = smul.addr %s516, 8
        %s518 = scalar_lea.vmem %s3, %s517
        %p519 = pneg %p136
        %p520 = pneg %p133
        %p521 = scmp.lt.s32.totalorder %s30, 3
        %s522 = scalar_select %p521, %s30, 3
        %s523 = smul.addr %s522, 4
        %s524 = scalar_lea.vmem %s4, %s523
        %p525 = pneg %p162
        %p526 = pneg %p159
        %p527 = pneg %p183
        %p528 = pneg %p180
        %p529 = pneg %p209
        %p530 = pneg %p206
        %s531 = sand.u32 %s196, 1
        %s532 = scalar_lea.sflag [#allocation7], %s531
        %s533 = sand.u32 %s196, 1
        %s534 = smul.addr %s533, 8
        %s535 = scalar_lea.vmem [#allocation6], %s534
        %p536 = pneg %p237
        %p537 = pneg %p234
        %s538 = sand.u32 %s224, 1
        %s539 = scalar_lea.sflag [#allocation9], %s538
        %s540 = sand.u32 %s224, 1
        %s541 = smul.addr %s540, 8
        %s542 = scalar_lea.vmem [#allocation8], %s541
        %p543 = scmp.lt.s32.totalorder %s29, 1
        %s544 = scalar_select %p543, %s29, 1
        %s545 = smul.addr %s544, 8
        %s546 = scalar_lea.vmem %s3, %s545
        %p547 = scmp.lt.s32.totalorder %s30, 3
        %s548 = scalar_select %p547, %s30, 3
        %s549 = smul.addr %s548, 4
        %s550 = scalar_lea.vmem %s4, %s549
        %p552 = scmp.eq.s32.totalorder %s30, 0
        // Predicated region
        $region161: #{tpu_custom_call.1} parent=147 // pred_check
          %p553 = pneg %p552
        $region162: #{tpu_custom_call.1} parent=147 // pred_check_branch
          %555 = sbr.rel (%p553) target = $region164
        $region163: #{tpu_custom_call.1} parent=147 // pred_region
          %vm556 = vcmask 261120
          %557 = vst.msk [vmem:[#allocation2] sm:$0xff] %vm556, 0.0
        $region164: #{tpu_custom_call.1} parent=147 // pred_fallthru
          _
        %v558 = vld [vmem:[%s479] sm:$0xf]
        %v559 = vld [vmem:[%s479 + $0x4] sm:$0xf]
        %v560 = vld [vmem:[%s479 + $0x8] sm:$0xf]
        %v561 = vld [vmem:[%s486] sm:$0xf]
        %v562 = vld [vmem:[%s486 + $0x4] sm:$0xf]
        %v563 = vld [vmem:[%s486 + $0x8] sm:$0xf]
        %v564 = vld [vmem:[%s486 + $0xc] sm:$0xf]
        %v565 = vld [vmem:[%s486 + $0x10] sm:$0xf]
        %v566 = vld [vmem:[%s486 + $0x14] sm:$0xf]
        %v567 = vld [vmem:[%s486 + $0x18] sm:$0xf]
        %v568 = vld [vmem:[%s486 + $0x1c] sm:$0xf]
        %v569 = vld [vmem:[%s486 + $0x20] sm:$0xf]
        %v570 = vld [vmem:[%s486 + $0x24] sm:$0xf]
        %v571 = vld [vmem:[%s486 + $0x28] sm:$0xf]
        %v572 = vld [vmem:[%s486 + $0x2c] sm:$0xf]
        %v573 = vld [vmem:[%s493] sm:$0x1]
        %v574 = vld [vmem:[%s493 + $0x1] sm:$0x1]
        %v575 = vld [vmem:[%s493 + $0x2] sm:$0x1]
        %v579 = vlaneseq
        %v580 = vshrl.u32 %v579, 7
        %v581 = vsub.s32 0, %v580
        %v582 = vrot.slane %v573, %v581
        %v583 = vlaneseq
        %v584 = vshrl.u32 %v583, 7
        %v585 = vsub.s32 0, %v584
        %v586 = vrot.slane %v574, %v585
        %v587 = vlaneseq
        %v588 = vshrl.u32 %v587, 7
        %v589 = vsub.s32 0, %v588
        %v590 = vrot.slane %v575, %v589
        %v598 = vunpack.c.l.b16 %v561
        %v599 = vunpack.c.l.b16 %v562
        %v600 = vunpack.c.l.b16 %v563
        %v601 = vunpack.c.l.b16 %v564
        %v602 = vpack.c.b16 %v599, %v598
        %v603 = vpack.c.b16 %v601, %v600
        %vm606 = vcmask 261120
        %v608 = vsel %vm606, %v558, 0
        %610 = vmatprep.subr.bf16.mxu0 0
        %611 = vmatpush1.bf16.msra.mxu0 %v602
        %612 = vmatprep.subr.bf16.mxu0 0
        %613 = vmatpush1.bf16.msra.mxu0 %v603
        %614 = vmatprep.subr.bf16.mxu0 0
        %615 = vmatpush1.bf16.msra.mxu0 0
        %616 = vmatprep.subr.bf16.mxu0 0
        %617 = vmatpush1.bf16.msra.mxu0 0
        %618 = vmatprep.subr.bf16.mxu0 0
        %619 = vmatpush1.bf16.msra.mxu0 0
        %620 = vmatprep.subr.bf16.mxu0 0
        %621 = vmatpush1.bf16.msra.mxu0 0
        %622 = vmatprep.subr.bf16.mxu0 0
        %623 = vmatpush1.bf16.msra.mxu0 0
        %624 = vmatprep.subr.bf16.mxu0 0
        %625 = vmatpush1.bf16.msra.mxu0 0
        %626 = vmatprep.subr.bf16.mxu0 0
        %627 = vmatpush1.bf16.msra.mxu0 0
        %628 = vmatprep.subr.bf16.mxu0 0
        %629 = vmatpush1.bf16.msra.mxu0 0
        %630 = vmatprep.subr.bf16.mxu0 0
        %631 = vmatpush1.bf16.msra.mxu0 0
        %632 = vmatprep.subr.bf16.mxu0 0
        %633 = vmatpush1.bf16.msra.mxu0 0
        %634 = vmatprep.subr.bf16.mxu0 0
        %635 = vmatpush1.bf16.msra.mxu0 0
        %636 = vmatprep.subr.bf16.mxu0 0
        %637 = vmatpush1.bf16.msra.mxu0 0
        %638 = vmatprep.subr.bf16.mxu0 0
        %639 = vmatpush1.bf16.msra.mxu0 0
        %640 = vmatprep.subr.bf16.mxu0 0
        %641 = vmatpush1.bf16.msra.mxu0 0
        %642 = vmatprep.mubr.bf16.mxu0 0
        %643 = vmatmul.mubr.bf16.gmra.mrb[0].mxu0 %v608
        %v644 = vpop.f32.mrb[0].mxu0
        %v645 = vadd.f32 %v582, %v644
        %v646 = vpop.f32.mrb[0].mxu0
        %v647 = vpop.f32.mrb[0].mxu0
        %v648 = vpop.f32.mrb[0].mxu0
        %649 = vdwg.mxu0
        %v654 = vunpack.c.l.b16 %v565
        %v655 = vunpack.c.l.b16 %v566
        %v656 = vunpack.c.l.b16 %v567
        %v657 = vunpack.c.l.b16 %v568
        %v658 = vpack.c.b16 %v655, %v654
        %v659 = vpack.c.b16 %v657, %v656
        %v663 = vsel %vm606, %v559, 0
        %665 = vmatprep.subr.bf16.mxu0 0
        %666 = vmatpush1.bf16.msra.mxu0 %v658
        %667 = vmatprep.subr.bf16.mxu0 0
        %668 = vmatpush1.bf16.msra.mxu0 %v659
        %669 = vmatprep.subr.bf16.mxu0 0
        %670 = vmatpush1.bf16.msra.mxu0 0
        %671 = vmatprep.subr.bf16.mxu0 0
        %672 = vmatpush1.bf16.msra.mxu0 0
        %673 = vmatprep.subr.bf16.mxu0 0
        %674 = vmatpush1.bf16.msra.mxu0 0
        %675 = vmatprep.subr.bf16.mxu0 0
        %676 = vmatpush1.bf16.msra.mxu0 0
        %677 = vmatprep.subr.bf16.mxu0 0
        %678 = vmatpush1.bf16.msra.mxu0 0
        %679 = vmatprep.subr.bf16.mxu0 0
        %680 = vmatpush1.bf16.msra.mxu0 0
        %681 = vmatprep.subr.bf16.mxu0 0
        %682 = vmatpush1.bf16.msra.mxu0 0
        %683 = vmatprep.subr.bf16.mxu0 0
        %684 = vmatpush1.bf16.msra.mxu0 0
        %685 = vmatprep.subr.bf16.mxu0 0
        %686 = vmatpush1.bf16.msra.mxu0 0
        %687 = vmatprep.subr.bf16.mxu0 0
        %688 = vmatpush1.bf16.msra.mxu0 0
        %689 = vmatprep.subr.bf16.mxu0 0
        %690 = vmatpush1.bf16.msra.mxu0 0
        %691 = vmatprep.subr.bf16.mxu0 0
        %692 = vmatpush1.bf16.msra.mxu0 0
        %693 = vmatprep.subr.bf16.mxu0 0
        %694 = vmatpush1.bf16.msra.mxu0 0
        %695 = vmatprep.subr.bf16.mxu0 0
        %696 = vmatpush1.bf16.msra.mxu0 0
        %697 = vmatprep.mubr.bf16.mxu0 0
        %698 = vmatmul.mubr.bf16.gmra.mrb[0].mxu0 %v663
        %v699 = vpop.f32.mrb[0].mxu0
        %v700 = vadd.f32 %v586, %v699
        %v701 = vpop.f32.mrb[0].mxu0
        %v702 = vpop.f32.mrb[0].mxu0
        %v703 = vpop.f32.mrb[0].mxu0
        %704 = vdwg.mxu0
        %v709 = vunpack.c.l.b16 %v569
        %v710 = vunpack.c.l.b16 %v570
        %v711 = vunpack.c.l.b16 %v571
        %v712 = vunpack.c.l.b16 %v572
        %v713 = vpack.c.b16 %v710, %v709
        %v714 = vpack.c.b16 %v712, %v711
        %v718 = vsel %vm606, %v560, 0
        %720 = vmatprep.subr.bf16.mxu0 0
        %721 = vmatpush1.bf16.msra.mxu0 %v713
        %722 = vmatprep.subr.bf16.mxu0 0
        %723 = vmatpush1.bf16.msra.mxu0 %v714
        %724 = vmatprep.subr.bf16.mxu0 0
        %725 = vmatpush1.bf16.msra.mxu0 0
        %726 = vmatprep.subr.bf16.mxu0 0
        %727 = vmatpush1.bf16.msra.mxu0 0
        %728 = vmatprep.subr.bf16.mxu0 0
        %729 = vmatpush1.bf16.msra.mxu0 0
        %730 = vmatprep.subr.bf16.mxu0 0
        %731 = vmatpush1.bf16.msra.mxu0 0
        %732 = vmatprep.subr.bf16.mxu0 0
        %733 = vmatpush1.bf16.msra.mxu0 0
        %734 = vmatprep.subr.bf16.mxu0 0
        %735 = vmatpush1.bf16.msra.mxu0 0
        %736 = vmatprep.subr.bf16.mxu0 0
        %737 = vmatpush1.bf16.msra.mxu0 0
        %738 = vmatprep.subr.bf16.mxu0 0
        %739 = vmatpush1.bf16.msra.mxu0 0
        %740 = vmatprep.subr.bf16.mxu0 0
        %741 = vmatpush1.bf16.msra.mxu0 0
        %742 = vmatprep.subr.bf16.mxu0 0
        %743 = vmatpush1.bf16.msra.mxu0 0
        %744 = vmatprep.subr.bf16.mxu0 0
        %745 = vmatpush1.bf16.msra.mxu0 0
        %746 = vmatprep.subr.bf16.mxu0 0
        %747 = vmatpush1.bf16.msra.mxu0 0
        %748 = vmatprep.subr.bf16.mxu0 0
        %749 = vmatpush1.bf16.msra.mxu0 0
        %750 = vmatprep.subr.bf16.mxu0 0
        %751 = vmatpush1.bf16.msra.mxu0 0
        %752 = vmatprep.mubr.bf16.mxu0 0
        %753 = vmatmul.mubr.bf16.gmra.mrb[0].mxu0 %v718
        %v754 = vpop.f32.mrb[0].mxu0
        %v755 = vadd.f32 %v590, %v754
        %v756 = vpop.f32.mrb[0].mxu0
        %v757 = vpop.f32.mrb[0].mxu0
        %v758 = vpop.f32.mrb[0].mxu0
        %759 = vdwg.mxu0
        %v760 = vpack.c.bf16 %v645, %v645
        %v761 = vpack.c.bf16 %v700, %v700
        %v762 = vld [vmem:[%s546] sm:$0xff]
        %vm763 = vcmask 64512
        %v765 = vsel %vm763, %v760, 0
        %v768 = vsel %vm763, %v761, 0
        %770 = vmatprep.subr.bf16.mxu0 0
        %771 = vmatpush1.bf16.xpose.msra.mxu0 %v768
        %772 = vmatprep.subr.bf16.mxu0 0
        %773 = vmatpush1.bf16.xpose.msra.mxu0 0
        %774 = vmatprep.subr.bf16.mxu0 0
        %775 = vmatpush1.bf16.xpose.msra.mxu0 0
        %776 = vmatprep.subr.bf16.mxu0 0
        %777 = vmatpush1.bf16.xpose.msra.mxu0 0
        %778 = vmatprep.subr.bf16.mxu0 0
        %779 = vmatpush1.bf16.xpose.msra.mxu0 0
        %780 = vmatprep.subr.bf16.mxu0 0
        %781 = vmatpush1.bf16.xpose.msra.mxu0 0
        %782 = vmatprep.subr.bf16.mxu0 0
        %783 = vmatpush1.bf16.xpose.msra.mxu0 0
        %784 = vmatprep.subr.bf16.mxu0 0
        %785 = vmatpush1.bf16.xpose.msra.mxu0 0
        %786 = vmatprep.subr.bf16.mxu0 0
        %787 = vmatpush1.bf16.xpose.msra.mxu0 0
        %788 = vmatprep.subr.bf16.mxu0 0
        %789 = vmatpush1.bf16.xpose.msra.mxu0 0
        %790 = vmatprep.subr.bf16.mxu0 0
        %791 = vmatpush1.bf16.xpose.msra.mxu0 0
        %792 = vmatprep.subr.bf16.mxu0 0
        %793 = vmatpush1.bf16.xpose.msra.mxu0 0
        %794 = vmatprep.subr.bf16.mxu0 0
        %795 = vmatpush1.bf16.xpose.msra.mxu0 0
        %796 = vmatprep.subr.bf16.mxu0 0
        %797 = vmatpush1.bf16.xpose.msra.mxu0 0
        %798 = vmatprep.subr.bf16.mxu0 0
        %799 = vmatpush1.bf16.xpose.msra.mxu0 0
        %800 = vmatprep.subr.bf16.mxu0 0
        %801 = vmatpush1.bf16.xpose.msra.mxu0 0
        %802 = vmatprep.mubr.bf16.mxu0 0
        %803 = vmatmul.mubr.bf16.gmra.mrb[0].mxu0 %v765
        %v804 = vpop.f32.mrb[0].mxu0
        %v805 = vadd.f32 %v762, %v804
        %v806 = vpop.f32.mrb[0].mxu0
        %v807 = vpop.f32.mrb[0].mxu0
        %v808 = vpop.f32.mrb[0].mxu0
        %809 = vdwg.mxu0
        %v810 = vsel %vm763, %v805, -inf
        %811 = vmax.xlane.f32.xlu0 %v810
        %v812 = vpop.xlane.xlu0 %811
        %v813 = vsub.f32 %v805, %v812
        %v814 = vmul.f32 %v813, 1.442695
        %v815 = vpow.pop %v814
        %v816 = vsel %vm763, %v815, 0.0
        %817 = vadd.xlane.f32.xlu0 %v816
        %v818 = vpop.xlane.xlu0 %817
        %v819 = vrcp.pop %v818
        %v820 = vmul.f32 %v815, %v819
        %821 = vst.msk [vmem:[%s542] sm:$0xff] %vm763, %v820
        %v822 = vpack.c.bf16 %v820, %v820
        %v823 = vpack.c.bf16 %v755, %v755
        %v825 = vsel %vm763, %v822, 0
        %vm827 = vcmask 1043456
        %v829 = vsel %vm827, %v823, 0
        %831 = vmatprep.subr.bf16.mxu0 0
        %832 = vmatpush1.bf16.msra.mxu0 %v829
        %833 = vmatprep.subr.bf16.mxu0 0
        %834 = vmatpush1.bf16.msra.mxu0 0
        %835 = vmatprep.subr.bf16.mxu0 0
        %836 = vmatpush1.bf16.msra.mxu0 0
        %837 = vmatprep.subr.bf16.mxu0 0
        %838 = vmatpush1.bf16.msra.mxu0 0
        %839 = vmatprep.subr.bf16.mxu0 0
        %840 = vmatpush1.bf16.msra.mxu0 0
        %841 = vmatprep.subr.bf16.mxu0 0
        %842 = vmatpush1.bf16.msra.mxu0 0
        %843 = vmatprep.subr.bf16.mxu0 0
        %844 = vmatpush1.bf16.msra.mxu0 0
        %845 = vmatprep.subr.bf16.mxu0 0
        %846 = vmatpush1.bf16.msra.mxu0 0
        %847 = vmatprep.subr.bf16.mxu0 0
        %848 = vmatpush1.bf16.msra.mxu0 0
        %849 = vmatprep.subr.bf16.mxu0 0
        %850 = vmatpush1.bf16.msra.mxu0 0
        %851 = vmatprep.subr.bf16.mxu0 0
        %852 = vmatpush1.bf16.msra.mxu0 0
        %853 = vmatprep.subr.bf16.mxu0 0
        %854 = vmatpush1.bf16.msra.mxu0 0
        %855 = vmatprep.subr.bf16.mxu0 0
        %856 = vmatpush1.bf16.msra.mxu0 0
        %857 = vmatprep.subr.bf16.mxu0 0
        %858 = vmatpush1.bf16.msra.mxu0 0
        %859 = vmatprep.subr.bf16.mxu0 0
        %860 = vmatpush1.bf16.msra.mxu0 0
        %861 = vmatprep.subr.bf16.mxu0 0
        %862 = vmatpush1.bf16.msra.mxu0 0
        %863 = vmatprep.mubr.bf16.mxu0 0
        %864 = vmatmul.mubr.bf16.gmra.mrb[0].mxu0 %v825
        %v865 = vpop.f32.mrb[0].mxu0
        %v866 = vadd.f32 0.0, %v865
        %v867 = vpop.f32.mrb[0].mxu0
        %v868 = vpop.f32.mrb[0].mxu0
        %v869 = vpop.f32.mrb[0].mxu0
        %870 = vdwg.mxu0
        %v871 = vld [vmem:[#allocation2] sm:$0xff]
        %v872 = vpack.c.bf16 %v866, %v866
        %v873 = vld [vmem:[%s550] sm:$0xf]
        %v875 = vsel %vm763, %v872, 0
        %v878 = vsel %vm827, %v873, 0
        %880 = vmatprep.subr.bf16.mxu0 0
        %881 = vmatpush1.bf16.msra.mxu0 %v878
        %882 = vmatprep.subr.bf16.mxu0 0
        %883 = vmatpush1.bf16.msra.mxu0 0
        %884 = vmatprep.subr.bf16.mxu0 0
        %885 = vmatpush1.bf16.msra.mxu0 0
        %886 = vmatprep.subr.bf16.mxu0 0
        %887 = vmatpush1.bf16.msra.mxu0 0
        %888 = vmatprep.subr.bf16.mxu0 0
        %889 = vmatpush1.bf16.msra.mxu0 0
        %890 = vmatprep.subr.bf16.mxu0 0
        %891 = vmatpush1.bf16.msra.mxu0 0
        %892 = vmatprep.subr.bf16.mxu0 0
        %893 = vmatpush1.bf16.msra.mxu0 0
        %894 = vmatprep.subr.bf16.mxu0 0
        %895 = vmatpush1.bf16.msra.mxu0 0
        %896 = vmatprep.subr.bf16.mxu0 0
        %897 = vmatpush1.bf16.msra.mxu0 0
        %898 = vmatprep.subr.bf16.mxu0 0
        %899 = vmatpush1.bf16.msra.mxu0 0
        %900 = vmatprep.subr.bf16.mxu0 0
        %901 = vmatpush1.bf16.msra.mxu0 0
        %902 = vmatprep.subr.bf16.mxu0 0
        %903 = vmatpush1.bf16.msra.mxu0 0
        %904 = vmatprep.subr.bf16.mxu0 0
        %905 = vmatpush1.bf16.msra.mxu0 0
        %906 = vmatprep.subr.bf16.mxu0 0
        %907 = vmatpush1.bf16.msra.mxu0 0
        %908 = vmatprep.subr.bf16.mxu0 0
        %909 = vmatpush1.bf16.msra.mxu0 0
        %910 = vmatprep.subr.bf16.mxu0 0
        %911 = vmatpush1.bf16.msra.mxu0 0
        %912 = vmatprep.mubr.bf16.mxu0 0
        %913 = vmatmul.mubr.bf16.gmra.mrb[0].mxu0 %v875
        %v914 = vpop.f32.mrb[0].mxu0
        %v915 = vadd.f32 0.0, %v914
        %v916 = vpop.f32.mrb[0].mxu0
        %v917 = vpop.f32.mrb[0].mxu0
        %v918 = vpop.f32.mrb[0].mxu0
        %919 = vdwg.mxu0
        %v920 = vadd.f32 %v871, %v915
        %921 = vst.msk [vmem:[#allocation2] sm:$0xff] %vm606, %v920
        %p922 = scmp.eq.s32.totalorder %s30, 3
        // Predicated region
        $region165: #{tpu_custom_call.1} parent=147 // pred_check
          %p923 = pneg %p922
        $region166: #{tpu_custom_call.1} parent=147 // pred_check_branch
          %925 = sbr.rel (%p923) target = $region168
        $region167: #{tpu_custom_call.1} parent=147 // pred_region
          %v926 = vld [vmem:[%s5] sm:$0x7]
          %v927 = vld [vmem:[%s479] sm:$0xf]
          %v928 = vunpack.c.l.bf16 %v927
          %v929 = vld [vmem:[#allocation2] sm:$0xff]
          %v930 = vlaneseq
          %v931 = vshrl.u32 %v930, 7
          %v932 = vsub.s32 0, %v931
          %v933 = vrot.slane %v926, %v932
          %v934 = vadd.f32 %v929, %v933
          %v935 = vadd.f32 %v934, %v928
          %v936 = vsel %vm606, %v935, 0.0
          %937 = vadd.xlane.f32.xlu0 %v936
          %v938 = vpop.xlane.xlu0 %937
          %v939 = vrcp.pop 32.0
          %v940 = vmul.f32 %v938, %v939
          %v941 = vsub.f32 %v935, %v940
          %v942 = vmul.f32 %v941, %v941
          %v943 = vsel %vm606, %v942, 0.0
          %944 = vadd.xlane.f32.xlu0 %v943
          %v945 = vpop.xlane.xlu0 %944
          %v946 = vmul.f32 %v945, %v939
          %v947 = vadd.f32 %v946, 1e-05
          %v948 = vrsqrt.pop %v947
          %v949 = vmul.f32 %v941, %v948
          %v950 = vlaneseq
          %v951 = vshrl.u32 %v950, 7
          %v952 = vsub.s32 1, %v951
          %v953 = vrot.slane %v926, %v952
          %v954 = vmul.f32 %v949, %v953
          %v955 = vlaneseq
          %v956 = vshrl.u32 %v955, 7
          %v957 = vsub.s32 2, %v956
          %v958 = vrot.slane %v926, %v957
          %v959 = vadd.f32 %v954, %v958
          %960 = vst.msk [vmem:[%s535] sm:$0xff] %vm606, %v959
        $region168: #{tpu_custom_call.1} parent=147 // pred_fallthru
          _
        %s961 = sand.u32 %s196, 1
        %s962 = scalar_lea.sflag [#allocation7], %s961
        %s963 = sand.u32 %s196, 1
        %s964 = smul.addr %s963, 8
        %s965 = scalar_lea.vmem [#allocation6], %s964
        %s966 = sand.u32 %s224, 1
        %s967 = scalar_lea.sflag [#allocation9], %s966
        %s968 = sand.u32 %s224, 1
        %s969 = smul.addr %s968, 8
        %s970 = scalar_lea.vmem [#allocation8], %s969
        // Predicated region
        $region169: #{tpu_custom_call.1} parent=147 // pred_check
          %p971 = pneg %p206
        $region170: #{tpu_custom_call.1} parent=147 // pred_check_branch
          %973 = sbr.rel (%p971) target = $region172
        $region171: #{tpu_custom_call.1} parent=147 // pred_region
          %s975 = ssub.s32 128, 128
          %976 = vsyncadd %s962, %s975
          %s977 = smul.addr %s29, 128
          %s978 = scalar_lea.hbm %s6, %s977
          %s980 = sshll.u32 %s965, 4
          %s981 = int_to_ptr.vmem [resolvable:$true] %s980
          %983 = dma.vmem_to_hbm [thread:$0]  %s981, 128, %s978, %s962
        $region172: #{tpu_custom_call.1} parent=147 // pred_fallthru
          _
        // Predicated region
        $region173: #{tpu_custom_call.1} parent=147 // pred_check
          %p984 = pneg %p234
        $region174: #{tpu_custom_call.1} parent=147 // pred_check_branch
          %986 = sbr.rel (%p984) target = $region176
        $region175: #{tpu_custom_call.1} parent=147 // pred_region
          %s988 = ssub.s32 128, 128
          %989 = vsyncadd %s967, %s988
          %s990 = smul.addr %s29, 4
          %s991 = sadd.s32 %s30, %s990
          %s992 = smul.addr %s991, 128
          %s993 = scalar_lea.hbm %s7, %s992
          %s995 = sshll.u32 %s970, 4
          %s996 = int_to_ptr.vmem [resolvable:$true] %s995
          %998 = dma.vmem_to_hbm [thread:$0]  %s996, 128, %s993, %s967
        $region176: #{tpu_custom_call.1} parent=147 // pred_fallthru
          _
      $region148: #{tpu_custom_call.1} parent=5 // pred_fallthru
        _
      %p999 = scmp.le.s32.totalorder 2, %s20
      // Predicated region
      $region177: #{tpu_custom_call.1} parent=5 // pred_check
        %p1000 = pneg %p999
      $region178: #{tpu_custom_call.1} parent=5 // pred_check_branch
        %1002 = sbr.rel (%p1000) target = $region180
      $region179: #{tpu_custom_call.1} parent=5 // pred_region
        %s1003 = ssub.s32 %s20, 2
        // Predicated region
        $region181: #{tpu_custom_call.1} parent=179 // pred_check
          %p1004 = pneg %p212
        $region182: #{tpu_custom_call.1} parent=179 // pred_check_branch
          %1006 = sbr.rel (%p1004) target = $region184
        $region183: #{tpu_custom_call.1} parent=179 // pred_region
          %s1007 = sand.u32 %s197, 1
          %s1008 = scalar_lea.sflag [#allocation7], %s1007
          %s1009 = sand.u32 %s197, 1
          %s1010 = smul.addr %s1009, 8
          %s1011 = scalar_lea.vmem [#allocation6], %s1010
          %1012 = dma.done %s1008, 128
        $region184: #{tpu_custom_call.1} parent=179 // pred_fallthru
          _
        // Predicated region
        $region185: #{tpu_custom_call.1} parent=179 // pred_check
          %p1013 = pneg %p240
        $region186: #{tpu_custom_call.1} parent=179 // pred_check_branch
          %1015 = sbr.rel (%p1013) target = $region188
        $region187: #{tpu_custom_call.1} parent=179 // pred_region
          %s1016 = sand.u32 %s225, 1
          %s1017 = scalar_lea.sflag [#allocation9], %s1016
          %s1018 = sand.u32 %s225, 1
          %s1019 = smul.addr %s1018, 8
          %s1020 = scalar_lea.vmem [#allocation8], %s1019
          %1021 = dma.done %s1017, 128
        $region188: #{tpu_custom_call.1} parent=179 // pred_fallthru
          _
      $region180: #{tpu_custom_call.1} parent=5 // pred_fallthru
        _
    $region6: #{tpu_custom_call.1} parent=1 // loop_footer
      %s24 = sadd.s32 1, %s20
    $region7: #{tpu_custom_call.1} parent=1 // loop_footer_branch
      %19 = sbr.rel target = $region3
    $region8: #{tpu_custom_call.1} parent=1 // loop_exit
      _
    %1022 = vsyncpa [#allocation7], 1
    %s1023 = scalar_lea.sflag [#allocation7], 1
    %1024 = vsyncpa %s1023, 1
    %1025 = vsyncpa [#allocation9], 1
    %s1026 = scalar_lea.sflag [#allocation9], 1
    %1027 = vsyncpa %s1026, 1

</llo_original>
